<compile_context>
chip_gen: v7x
topology: tpu7x:2x2x1
jax: 0.10.0
libtpu: 0.0.40
codegen_flags: <defaults>
</compile_context>

<pallas_src>
import math
import numpy as np
import jax
import jax.numpy as jnp
from jax import lax
from jax.experimental import pallas as pl
from jax.experimental.pallas import tpu as pltpu

# ----- config (small, consistent with the module: hidden divisible by num_heads) -----
B = 2             # batch
S = 8             # sequence length ("patches")
H = 32            # config.hidden_size
NUM_HEADS = 4     # config.transformer['num_heads']
DH = H // NUM_HEADS
MLP_DIM = 64      # config.transformer['mlp_dim']
EPS = 1e-6

R = B * S                  # token rows per call (16)
GS = NUM_HEADS * R         # grouped attention rows (64), ordered (head, batch, seq)
HG = 3 * DH                # per-head lane group width in the interleaved qkv (24)
LANES = 128                # lane-aligned packed parameter blob width
W_ROWS = 3 * H + MLP_DIM   # 32 (w_qkv) + 32 (wo) + 32 (w1) + 64 (w2) = 160
NUM_LAYERS = 1             # a single `Block`; >1 stacks layers in the same pallas_call

# Static additive block-diagonal mask: rows attend only within their (head, batch) block.
_idx = np.arange(GS)
_same_block = (_idx[:, None] // S) == (_idx[None, :] // S)
ATTN_MASK = jnp.asarray(np.where(_same_block, 0.0, -1e9).astype(np.float32))   # (GS, GS)


def _layernorm(x, w, b):
    # torch.nn.LayerNorm semantics: biased variance over last dim, eps inside sqrt
    mu = jnp.mean(x, axis=-1, keepdims=True)
    var = jnp.mean((x - mu) ** 2, axis=-1, keepdims=True)
    return (x - mu) * lax.rsqrt(var + EPS) * w + b


def _block_layer(x, Wf, Vf, mask):
    """One Block applied to x: (R, H) f32. Wf: (W_ROWS, 128), Vf: (8, 128)."""
    w_qkv = Wf[0:H, :]                                    # (H, 128) full lanes (pad cols are 0)
    wo = Wf[H:2 * H, 0:H]                                 # (H, H)
    w1 = Wf[2 * H:3 * H, 0:MLP_DIM]                       # (H, MLP)
    w2 = Wf[3 * H:3 * H + MLP_DIM, 0:H]                   # (MLP, H)
    ln1w, ln1b = Vf[0:1, 0:H], Vf[1:2, 0:H]
    b_qkv = Vf[2:3, :]                                    # (1, 128) full lanes (pad = 0)
    bo = Vf[3:4, 0:H]
    ln2w, ln2b = Vf[4:5, 0:H], Vf[5:6, 0:H]
    b1 = Vf[6:7, 0:MLP_DIM]
    b2 = Vf[7:8, 0:H]

    # ---- attention_norm ----
    xn = _layernorm(x, ln1w, ln1b)

    # ---- fused QKV projection (single MXU matmul, full 128-lane weight/bias) ----
    qkv = jnp.dot(xn, w_qkv, preferred_element_type=jnp.float32) + b_qkv       # (R, 128)

    # ---- block-diagonal multi-head attention ----
    # Weights were packed head-interleaved: lanes [h*HG:(h+1)*HG] = [q_h | k_h | v_h],
    # so grouping to (head, batch, seq) rows is one lane slice per head + one concat.
    qkvg = jnp.concatenate(
        [qkv[:, h * HG:(h + 1) * HG] for h in range(NUM_HEADS)], axis=0)        # (GS, 3*DH)
    qg = qkvg[:, 0:DH]
    kg = qkvg[:, DH:2 * DH]
    vg = qkvg[:, 2 * DH:3 * DH]

    scale = 1.0 / math.sqrt(DH)
    scores = lax.dot_general(qg, kg, (((1,), (1,)), ((), ())),
                             preferred_element_type=jnp.float32) * scale + mask  # (GS, GS)
    scores = scores - jnp.max(scores, axis=-1, keepdims=True)
    e = jnp.exp(scores)
    probs = e / jnp.sum(e, axis=-1, keepdims=True)        # exact softmax (f32 accuracy)
    ctx_g = jnp.dot(probs, vg, preferred_element_type=jnp.float32)               # (GS, DH)

    # ungroup back to (R, H) with head-major lanes (matches torch permute+reshape)
    ctx = jnp.concatenate(
        [ctx_g[h * R:(h + 1) * R, :] for h in range(NUM_HEADS)], axis=1)         # (R, H)

    # ---- output projection + residual ----
    x1 = jnp.dot(ctx, wo, preferred_element_type=jnp.float32) + bo + x

    # ---- ffn_norm + Mlp (fc1 -> ReLU -> fc2) + residual ----
    xn2 = _layernorm(x1, ln2w, ln2b)
    hid = jnp.maximum(jnp.dot(xn2, w1, preferred_element_type=jnp.float32) + b1, 0.0)
    mlp = jnp.dot(hid, w2, preferred_element_type=jnp.float32) + b2
    return mlp + x1


def make_block_kernel(num_layers):
    def kernel(x_ref, w_ref, v_ref, m_ref, out_ref):
        x = x_ref[...].astype(jnp.float32)                # (R, H)
        mask = m_ref[...]                                 # (GS, GS)
        for layer in range(num_layers):                   # static unroll; params stay in VMEM
            x = _block_layer(x, w_ref[layer], v_ref[layer], mask)
        out_ref[...] = x.astype(out_ref.dtype)
    return kernel


def pack_params(params):
    """Pack the 16 parameter arrays into 2 lane-aligned blobs (weights, biases/LN)."""
    (ln1_w, ln1_b, wq, bq, wk, bk, wv, bv, wo, bo, ln2_w, ln2_b, w1, b1, w2, b2) = params

    # Head-interleaved fused QKV: lanes [h*3DH:(h+1)*3DH] = [Wq_h | Wk_h | Wv_h].
    w_qkv = jnp.concatenate(
        [jnp.concatenate([wq[:, h * DH:(h + 1) * DH],
                          wk[:, h * DH:(h + 1) * DH],
                          wv[:, h * DH:(h + 1) * DH]], axis=1)
         for h in range(NUM_HEADS)], axis=1)              # (H, 3H)
    b_qkv = jnp.concatenate(
        [jnp.concatenate([bq[h * DH:(h + 1) * DH],
                          bk[h * DH:(h + 1) * DH],
                          bv[h * DH:(h + 1) * DH]], axis=0)
         for h in range(NUM_HEADS)], axis=0)              # (3H,)

    def pad_w(w):
        return jnp.pad(w, ((0, 0), (0, LANES - w.shape[1])))

    def pad_v(v):
        return jnp.pad(v, (0, LANES - v.shape[0]))

    w_blob = jnp.concatenate(
        [pad_w(w_qkv), pad_w(wo), pad_w(w1), pad_w(w2)], axis=0)   # (W_ROWS, 128)
    v_blob = jnp.stack(
        [pad_v(ln1_w), pad_v(ln1_b), pad_v(b_qkv), pad_v(bo),
         pad_v(ln2_w), pad_v(ln2_b), pad_v(b1), pad_v(b2)], axis=0)  # (8, 128)
    # Leading layer axis so several layers can share one pallas_call (NUM_LAYERS=1 here).
    return w_blob.astype(jnp.float32)[None], v_blob.astype(jnp.float32)[None]


def block_forward(x, params):
    """x: (B, S, H) float32. Returns (out, None)  (vis=False => attention weights None)."""
    w_blob, v_blob = pack_params(params)                  # (1, 160, 128), (1, 8, 128)
    xf = x.reshape(R, H)                                  # lane-friendly 2-D slab

    flops = NUM_LAYERS * (2 * R * H * (3 * H) + 2 * 2 * GS * GS * DH
                          + 2 * R * H * H + 2 * 2 * R * H * MLP_DIM)
    cost = pl.CostEstimate(
        flops=flops,
        transcendentals=NUM_LAYERS * (GS * GS + 2 * R),
        bytes_accessed=4 * (2 * R * H + w_blob.size + v_blob.size + GS * GS),
    )

    out = pl.pallas_call(
        make_block_kernel(NUM_LAYERS),
        out_shape=jax.ShapeDtypeStruct((R, H), x.dtype),
        grid_spec=pltpu.PrefetchScalarGridSpec(
            num_scalar_prefetch=0,
            grid=(1,),
            in_specs=[
                pl.BlockSpec((R, H), lambda i: (0, 0)),
                pl.BlockSpec(w_blob.shape, lambda i: (0, 0, 0)),
                pl.BlockSpec(v_blob.shape, lambda i: (0, 0, 0)),
                pl.BlockSpec((GS, GS), lambda i: (0, 0)),
            ],
            out_specs=pl.BlockSpec((R, H), lambda i: (0, 0)),
        ),
        compiler_params=pltpu.CompilerParams(dimension_semantics=("arbitrary",)),
        cost_estimate=cost,
    )(xf, w_blob, v_blob, ATTN_MASK)
    return out.reshape(B, S, H), None


def init_params(key):
    ks = jax.random.split(key, 12)
    # LayerNorm params (torch default: weight=1, bias=0)
    ln1_w = jnp.ones((H,), jnp.float32)
    ln1_b = jnp.zeros((H,), jnp.float32)
    ln2_w = jnp.ones((H,), jnp.float32)
    ln2_b = jnp.zeros((H,), jnp.float32)
    # Attention linears (stored as (in, out))
    wq = jax.random.normal(ks[0], (H, H), jnp.float32) * 0.05
    wk = jax.random.normal(ks[1], (H, H), jnp.float32) * 0.05
    wv = jax.random.normal(ks[2], (H, H), jnp.float32) * 0.05
    wo = jax.random.normal(ks[3], (H, H), jnp.float32) * 0.05
    bq = jax.random.normal(ks[4], (H,), jnp.float32) * 0.01
    bk = jax.random.normal(ks[5], (H,), jnp.float32) * 0.01
    bv = jax.random.normal(ks[6], (H,), jnp.float32) * 0.01
    bo = jax.random.normal(ks[7], (H,), jnp.float32) * 0.01
    # Mlp: xavier_uniform weights, bias ~ N(0, 1e-6)
    lim1 = math.sqrt(6.0 / (H + MLP_DIM))
    w1 = jax.random.uniform(ks[8], (H, MLP_DIM), jnp.float32, -lim1, lim1)
    w2 = jax.random.uniform(ks[9], (MLP_DIM, H), jnp.float32, -lim1, lim1)
    b1 = jax.random.normal(ks[10], (MLP_DIM,), jnp.float32) * 1e-6
    b2 = jax.random.normal(ks[11], (H,), jnp.float32) * 1e-6
    return (ln1_w, ln1_b, wq, bq, wk, bk, wv, bv, wo, bo, ln2_w, ln2_b, w1, b1, w2, b2)


def block_reference(x, params):
    """Pure-JAX reference mirroring the PyTorch forward."""
    (ln1_w, ln1_b, wq, bq, wk, bk, wv, bv, wo, bo, ln2_w, ln2_b, w1, b1, w2, b2) = params
    h = x
    xn = _layernorm(x, ln1_w, ln1_b)
    q = xn @ wq + bq
    k = xn @ wk + bk
    v = xn @ wv + bv

    def split(t):
        return t.reshape(B, S, NUM_HEADS, DH).transpose(0, 2, 1, 3)

    qh, kh, vh = split(q), split(k), split(v)
    scores = jnp.einsum('bhqd,bhkd->bhqk', qh, kh) / math.sqrt(DH)
    probs = jax.nn.softmax(scores, axis=-1)
    ctx = jnp.einsum('bhqk,bhkd->bhqd', probs, vh)
    ctx = ctx.transpose(0, 2, 1, 3).reshape(B, S, H)
    attn_out = ctx @ wo + bo
    x1 = attn_out + h
    xn2 = _layernorm(x1, ln2_w, ln2_b)
    hid = jax.nn.relu(xn2 @ w1 + b1)
    mlp = hid @ w2 + b2
    return mlp + x1


if __name__ == "__main__":
    key = jax.random.PRNGKey(0)
    kx, kp = jax.random.split(key)
    x = jax.random.normal(kx, (B, S, H), jnp.float32)
    params = init_params(kp)

    out, weights = block_forward(x, params)
    out = jax.block_until_ready(out)

    ref = block_reference(x, params)
    assert out.shape == (B, S, H)
    assert weights is None  # vis=False in the module
    err = float(jnp.max(jnp.abs(out - ref)))
    assert jnp.allclose(out, ref, rtol=1e-4, atol=1e-4), err

    print("KERNEL_OK")
</pallas_src>

<mosaic_0001>
module attributes {stable_mosaic.version = 11 : i64} {
  func.func @kernel(%arg0: i32, %arg1: memref<16x32xf32, #tpu.memory_space<vmem>>, %arg2: memref<1x160x128xf32, #tpu.memory_space<vmem>>, %arg3: memref<1x8x128xf32, #tpu.memory_space<vmem>>, %arg4: memref<64x64xf32, #tpu.memory_space<vmem>>, %arg5: memref<16x32xf32, #tpu.memory_space<vmem>>) attributes {dimension_semantics = [#tpu.dimension_semantics<arbitrary>], iteration_bounds = array<i64: 1>, scalar_prefetch = 0 : i64, scratch_operands = 0 : i64, tpu.core_type = #tpu.core_type<tc>, window_params = [{pipeline_mode = #tpu.pipeline_mode<synchronous>, transform_indices = @transform_0, window_bounds = array<i64: 16, 32>}, {pipeline_mode = #tpu.pipeline_mode<synchronous>, transform_indices = @transform_1, window_bounds = array<i64: 1, 160, 128>}, {pipeline_mode = #tpu.pipeline_mode<synchronous>, transform_indices = @transform_2, window_bounds = array<i64: 1, 8, 128>}, {pipeline_mode = #tpu.pipeline_mode<synchronous>, transform_indices = @transform_3, window_bounds = array<i64: 64, 64>}, {pipeline_mode = #tpu.pipeline_mode<synchronous>, transform_indices = @transform_4, window_bounds = array<i64: 16, 32>}]} {
    %c0 = arith.constant 0 : index
    %c0_0 = arith.constant 0 : index
    %0 = vector.load %arg1[%c0, %c0_0] : memref<16x32xf32, #tpu.memory_space<vmem>>, vector<16x32xf32>
    %c0_1 = arith.constant 0 : index
    %c0_2 = arith.constant 0 : index
    %1 = vector.load %arg4[%c0_1, %c0_2] : memref<64x64xf32, #tpu.memory_space<vmem>>, vector<64x64xf32>
    %c0_3 = arith.constant 0 : index
    %c0_4 = arith.constant 0 : index
    %c0_5 = arith.constant 0 : index
    %2 = vector.load %arg2[%c0_3, %c0_4, %c0_5] : memref<1x160x128xf32, #tpu.memory_space<vmem>>, vector<1x160x128xf32>
    %3 = vector.shape_cast %2 : vector<1x160x128xf32> to vector<160x128xf32>
    %c0_6 = arith.constant 0 : index
    %c0_7 = arith.constant 0 : index
    %c0_8 = arith.constant 0 : index
    %4 = vector.load %arg3[%c0_6, %c0_7, %c0_8] : memref<1x8x128xf32, #tpu.memory_space<vmem>>, vector<1x8x128xf32>
    %5 = vector.shape_cast %4 : vector<1x8x128xf32> to vector<8x128xf32>
    %6 = vector.extract_strided_slice %3 {offsets = [0, 0], sizes = [32, 128], strides = [1, 1]} : vector<160x128xf32> to vector<32x128xf32>
    %7 = vector.extract_strided_slice %3 {offsets = [32, 0], sizes = [32, 32], strides = [1, 1]} : vector<160x128xf32> to vector<32x32xf32>
    %8 = vector.extract_strided_slice %3 {offsets = [64, 0], sizes = [32, 64], strides = [1, 1]} : vector<160x128xf32> to vector<32x64xf32>
    %9 = vector.extract_strided_slice %3 {offsets = [96, 0], sizes = [64, 32], strides = [1, 1]} : vector<160x128xf32> to vector<64x32xf32>
    %10 = vector.extract_strided_slice %5 {offsets = [0, 0], sizes = [1, 32], strides = [1, 1]} : vector<8x128xf32> to vector<1x32xf32>
    %11 = vector.extract_strided_slice %5 {offsets = [1, 0], sizes = [1, 32], strides = [1, 1]} : vector<8x128xf32> to vector<1x32xf32>
    %12 = vector.extract_strided_slice %5 {offsets = [2, 0], sizes = [1, 128], strides = [1, 1]} : vector<8x128xf32> to vector<1x128xf32>
    %13 = vector.extract_strided_slice %5 {offsets = [3, 0], sizes = [1, 32], strides = [1, 1]} : vector<8x128xf32> to vector<1x32xf32>
    %14 = vector.extract_strided_slice %5 {offsets = [4, 0], sizes = [1, 32], strides = [1, 1]} : vector<8x128xf32> to vector<1x32xf32>
    %15 = vector.extract_strided_slice %5 {offsets = [5, 0], sizes = [1, 32], strides = [1, 1]} : vector<8x128xf32> to vector<1x32xf32>
    %16 = vector.extract_strided_slice %5 {offsets = [6, 0], sizes = [1, 64], strides = [1, 1]} : vector<8x128xf32> to vector<1x64xf32>
    %17 = vector.extract_strided_slice %5 {offsets = [7, 0], sizes = [1, 32], strides = [1, 1]} : vector<8x128xf32> to vector<1x32xf32>
    %cst = arith.constant dense<0.000000e+00> : vector<16xf32>
    %18 = vector.multi_reduction <add>, %0, %cst [1] : vector<16x32xf32> to vector<16xf32>
    %19 = vector.shape_cast %18 : vector<16xf32> to vector<16x1xf32>
    %cst_9 = arith.constant 3.200000e+01 : f32
    %20 = vector.broadcast %cst_9 : f32 to vector<16x1xf32>
    %21 = arith.divf %19, %20 : vector<16x1xf32>
    %22 = vector.broadcast %21 : vector<16x1xf32> to vector<16x32xf32>
    %23 = arith.subf %0, %22 : vector<16x32xf32>
    %24 = arith.mulf %23, %23 : vector<16x32xf32>
    %cst_10 = arith.constant dense<0.000000e+00> : vector<16xf32>
    %25 = vector.multi_reduction <add>, %24, %cst_10 [1] : vector<16x32xf32> to vector<16xf32>
    %26 = vector.shape_cast %25 : vector<16xf32> to vector<16x1xf32>
    %cst_11 = arith.constant 3.200000e+01 : f32
    %27 = vector.broadcast %cst_11 : f32 to vector<16x1xf32>
    %28 = arith.divf %26, %27 : vector<16x1xf32>
    %29 = vector.broadcast %21 : vector<16x1xf32> to vector<16x32xf32>
    %30 = arith.subf %0, %29 : vector<16x32xf32>
    %cst_12 = arith.constant 9.99999997E-7 : f32
    %31 = vector.broadcast %cst_12 : f32 to vector<16x1xf32>
    %32 = arith.addf %28, %31 : vector<16x1xf32>
    %33 = math.rsqrt %32 : vector<16x1xf32>
    %34 = vector.broadcast %33 : vector<16x1xf32> to vector<16x32xf32>
    %35 = arith.mulf %30, %34 : vector<16x32xf32>
    %36 = vector.broadcast %10 : vector<1x32xf32> to vector<16x32xf32>
    %37 = arith.mulf %35, %36 : vector<16x32xf32>
    %38 = vector.broadcast %11 : vector<1x32xf32> to vector<16x32xf32>
    %39 = arith.addf %37, %38 : vector<16x32xf32>
    %cst_13 = arith.constant dense<0.000000e+00> : vector<16x128xf32>
    %40 = tpu.matmul %39, %6, %cst_13 {dimension_numbers = #tpu.dot_dimension_numbers<[1], [0], [0], [1], [0, 0, 1, 1], [], []>} : vector<16x32xf32>, vector<32x128xf32>, vector<16x128xf32> -> vector<16x128xf32>
    %41 = vector.broadcast %12 : vector<1x128xf32> to vector<16x128xf32>
    %42 = arith.addf %40, %41 : vector<16x128xf32>
    %43 = vector.extract_strided_slice %42 {offsets = [0, 0], sizes = [16, 24], strides = [1, 1]} : vector<16x128xf32> to vector<16x24xf32>
    %44 = vector.extract_strided_slice %42 {offsets = [0, 24], sizes = [16, 24], strides = [1, 1]} : vector<16x128xf32> to vector<16x24xf32>
    %45 = vector.extract_strided_slice %42 {offsets = [0, 48], sizes = [16, 24], strides = [1, 1]} : vector<16x128xf32> to vector<16x24xf32>
    %46 = vector.extract_strided_slice %42 {offsets = [0, 72], sizes = [16, 24], strides = [1, 1]} : vector<16x128xf32> to vector<16x24xf32>
    %47 = tpu.concatenate %43, %44, %45, %46 in 0 : vector<16x24xf32>, vector<16x24xf32>, vector<16x24xf32>, vector<16x24xf32> -> vector<64x24xf32>
    %48 = vector.extract_strided_slice %47 {offsets = [0, 0], sizes = [64, 8], strides = [1, 1]} : vector<64x24xf32> to vector<64x8xf32>
    %49 = vector.extract_strided_slice %47 {offsets = [0, 8], sizes = [64, 8], strides = [1, 1]} : vector<64x24xf32> to vector<64x8xf32>
    %50 = vector.extract_strided_slice %47 {offsets = [0, 16], sizes = [64, 8], strides = [1, 1]} : vector<64x24xf32> to vector<64x8xf32>
    %cst_14 = arith.constant dense<0.000000e+00> : vector<64x64xf32>
    %51 = tpu.matmul %48, %49, %cst_14 {dimension_numbers = #tpu.dot_dimension_numbers<[1], [1], [0], [0], [0, 0, 1, 0], [], []>} : vector<64x8xf32>, vector<64x8xf32>, vector<64x64xf32> -> vector<64x64xf32>
    %cst_15 = arith.constant 0.353553385 : f32
    %52 = vector.broadcast %cst_15 : f32 to vector<64x64xf32>
    %53 = arith.mulf %51, %52 : vector<64x64xf32>
    %54 = arith.addf %53, %1 : vector<64x64xf32>
    %cst_16 = arith.constant dense<0xFF800000> : vector<64xf32>
    %55 = vector.multi_reduction <maximumf>, %54, %cst_16 [1] : vector<64x64xf32> to vector<64xf32>
    %56 = vector.shape_cast %55 : vector<64xf32> to vector<64x1xf32>
    %57 = vector.broadcast %56 : vector<64x1xf32> to vector<64x64xf32>
    %58 = arith.subf %54, %57 : vector<64x64xf32>
    %59 = math.exp %58 : vector<64x64xf32>
    %cst_17 = arith.constant dense<0.000000e+00> : vector<64xf32>
    %60 = vector.multi_reduction <add>, %59, %cst_17 [1] : vector<64x64xf32> to vector<64xf32>
    %61 = vector.shape_cast %60 : vector<64xf32> to vector<64x1xf32>
    %62 = vector.broadcast %61 : vector<64x1xf32> to vector<64x64xf32>
    %63 = arith.divf %59, %62 : vector<64x64xf32>
    %cst_18 = arith.constant dense<0.000000e+00> : vector<64x8xf32>
    %64 = tpu.matmul %63, %50, %cst_18 {dimension_numbers = #tpu.dot_dimension_numbers<[1], [0], [0], [1], [0, 0, 1, 1], [], []>} : vector<64x64xf32>, vector<64x8xf32>, vector<64x8xf32> -> vector<64x8xf32>
    %65 = vector.extract_strided_slice %64 {offsets = [0, 0], sizes = [16, 8], strides = [1, 1]} : vector<64x8xf32> to vector<16x8xf32>
    %66 = vector.extract_strided_slice %64 {offsets = [16, 0], sizes = [16, 8], strides = [1, 1]} : vector<64x8xf32> to vector<16x8xf32>
    %67 = vector.extract_strided_slice %64 {offsets = [32, 0], sizes = [16, 8], strides = [1, 1]} : vector<64x8xf32> to vector<16x8xf32>
    %68 = vector.extract_strided_slice %64 {offsets = [48, 0], sizes = [16, 8], strides = [1, 1]} : vector<64x8xf32> to vector<16x8xf32>
    %69 = tpu.concatenate %65, %66, %67, %68 in 1 : vector<16x8xf32>, vector<16x8xf32>, vector<16x8xf32>, vector<16x8xf32> -> vector<16x32xf32>
    %cst_19 = arith.constant dense<0.000000e+00> : vector<16x32xf32>
    %70 = tpu.matmul %69, %7, %cst_19 {dimension_numbers = #tpu.dot_dimension_numbers<[1], [0], [0], [1], [0, 0, 1, 1], [], []>} : vector<16x32xf32>, vector<32x32xf32>, vector<16x32xf32> -> vector<16x32xf32>
    %71 = vector.broadcast %13 : vector<1x32xf32> to vector<16x32xf32>
    %72 = arith.addf %70, %71 : vector<16x32xf32>
    %73 = arith.addf %72, %0 : vector<16x32xf32>
    %cst_20 = arith.constant dense<0.000000e+00> : vector<16xf32>
    %74 = vector.multi_reduction <add>, %73, %cst_20 [1] : vector<16x32xf32> to vector<16xf32>
    %75 = vector.shape_cast %74 : vector<16xf32> to vector<16x1xf32>
    %cst_21 = arith.constant 3.200000e+01 : f32
    %76 = vector.broadcast %cst_21 : f32 to vector<16x1xf32>
    %77 = arith.divf %75, %76 : vector<16x1xf32>
    %78 = vector.broadcast %77 : vector<16x1xf32> to vector<16x32xf32>
    %79 = arith.subf %73, %78 : vector<16x32xf32>
    %80 = arith.mulf %79, %79 : vector<16x32xf32>
    %cst_22 = arith.constant dense<0.000000e+00> : vector<16xf32>
    %81 = vector.multi_reduction <add>, %80, %cst_22 [1] : vector<16x32xf32> to vector<16xf32>
    %82 = vector.shape_cast %81 : vector<16xf32> to vector<16x1xf32>
    %cst_23 = arith.constant 3.200000e+01 : f32
    %83 = vector.broadcast %cst_23 : f32 to vector<16x1xf32>
    %84 = arith.divf %82, %83 : vector<16x1xf32>
    %85 = vector.broadcast %77 : vector<16x1xf32> to vector<16x32xf32>
    %86 = arith.subf %73, %85 : vector<16x32xf32>
    %cst_24 = arith.constant 9.99999997E-7 : f32
    %87 = vector.broadcast %cst_24 : f32 to vector<16x1xf32>
    %88 = arith.addf %84, %87 : vector<16x1xf32>
    %89 = math.rsqrt %88 : vector<16x1xf32>
    %90 = vector.broadcast %89 : vector<16x1xf32> to vector<16x32xf32>
    %91 = arith.mulf %86, %90 : vector<16x32xf32>
    %92 = vector.broadcast %14 : vector<1x32xf32> to vector<16x32xf32>
    %93 = arith.mulf %91, %92 : vector<16x32xf32>
    %94 = vector.broadcast %15 : vector<1x32xf32> to vector<16x32xf32>
    %95 = arith.addf %93, %94 : vector<16x32xf32>
    %cst_25 = arith.constant dense<0.000000e+00> : vector<16x64xf32>
    %96 = tpu.matmul %95, %8, %cst_25 {dimension_numbers = #tpu.dot_dimension_numbers<[1], [0], [0], [1], [0, 0, 1, 1], [], []>} : vector<16x32xf32>, vector<32x64xf32>, vector<16x64xf32> -> vector<16x64xf32>
    %97 = vector.broadcast %16 : vector<1x64xf32> to vector<16x64xf32>
    %98 = arith.addf %96, %97 : vector<16x64xf32>
    %cst_26 = arith.constant 0.000000e+00 : f32
    %99 = vector.broadcast %cst_26 : f32 to vector<16x64xf32>
    %100 = arith.maximumf %98, %99 : vector<16x64xf32>
    %cst_27 = arith.constant dense<0.000000e+00> : vector<16x32xf32>
    %101 = tpu.matmul %100, %9, %cst_27 {dimension_numbers = #tpu.dot_dimension_numbers<[1], [0], [0], [1], [0, 0, 1, 1], [], []>} : vector<16x64xf32>, vector<64x32xf32>, vector<16x32xf32> -> vector<16x32xf32>
    %102 = vector.broadcast %17 : vector<1x32xf32> to vector<16x32xf32>
    %103 = arith.addf %101, %102 : vector<16x32xf32>
    %104 = arith.addf %103, %73 : vector<16x32xf32>
    %c0_28 = arith.constant 0 : index
    %c0_29 = arith.constant 0 : index
    %105 = vector.load %arg5[%c0_28, %c0_29] : memref<16x32xf32, #tpu.memory_space<vmem>>, vector<16x32xf32>
    tpu.vector_store %arg5[%c0_28, %c0_29], %104 {strides = array<i32>} : memref<16x32xf32, #tpu.memory_space<vmem>>, vector<16x32xf32>,
    return
  }
  func.func @transform_0(%arg0: i32) -> (i32, i32) {
    %c0_i32 = arith.constant 0 : i32
    %c0_i32_0 = arith.constant 0 : i32
    %c0_i32_1 = arith.constant 0 : i32
    return %c0_i32, %c0_i32_0 : i32, i32
  }
  func.func @transform_1(%arg0: i32) -> (i32, i32, i32) {
    %c0_i32 = arith.constant 0 : i32
    %c0_i32_0 = arith.constant 0 : i32
    %c0_i32_1 = arith.constant 0 : i32
    %c0_i32_2 = arith.constant 0 : i32
    return %c0_i32, %c0_i32_0, %c0_i32_1 : i32, i32, i32
  }
  func.func @transform_2(%arg0: i32) -> (i32, i32, i32) {
    %c0_i32 = arith.constant 0 : i32
    %c0_i32_0 = arith.constant 0 : i32
    %c0_i32_1 = arith.constant 0 : i32
    %c0_i32_2 = arith.constant 0 : i32
    return %c0_i32, %c0_i32_0, %c0_i32_1 : i32, i32, i32
  }
  func.func @transform_3(%arg0: i32) -> (i32, i32) {
    %c0_i32 = arith.constant 0 : i32
    %c0_i32_0 = arith.constant 0 : i32
    %c0_i32_1 = arith.constant 0 : i32
    return %c0_i32, %c0_i32_0 : i32, i32
  }
  func.func @transform_4(%arg0: i32) -> (i32, i32) {
    %c0_i32 = arith.constant 0 : i32
    %c0_i32_0 = arith.constant 0 : i32
    %c0_i32_1 = arith.constant 0 : i32
    return %c0_i32, %c0_i32_0 : i32, i32
  }
}

</mosaic_0001>

<llo_original>
// kernel: tpu_custom_call.1
$region0: #{tpu_custom_call.1}
  #allocation0 [shape = 'u32[]', space=smem, size = 0x4, offset = 0x4, fixed_abs, tag = 'smem constant byte address 0x4 - core index']
  #allocation1 [shape = 'u32[144,128]{1,0:T(1,128)}', space=vmem, size = 0x12000, scoped, tag = 'internal scratch']
  %s0 = inlined_call_operand.hbm [shape: f32[16,32], index: 0, kind: input, shape index: {}]
  %s1 = inlined_call_operand.hbm [shape: f32[1,160,128], index: 1, kind: input, shape index: {}]
  %s2 = inlined_call_operand.hbm [shape: f32[1,8,128], index: 2, kind: input, shape index: {}]
  %s3 = inlined_call_operand.hbm [shape: f32[64,64], index: 3, kind: input, shape index: {}]
  %s4 = inlined_call_operand.hbm [shape: f32[16,32], index: 4, kind: output, shape index: {}]
  %s5 = sld [smem:[#allocation0]]
  $region42: #{tpu_custom_call.1} parent=0
    _
  %s7 = ssub.s32 1, %s5
  %s8 = scalar_select 0, %s7, %s5
  $region1: #{tpu_custom_call.1} parent=0
    #allocation2 [shape = 'u8[8192]{0}', space=vmem, size = 0x2000, scoped, tag = 'input window, operand 0, single buffered']
    #allocation3 [shape = 's32[1]{0}', space=sflag, size = 0x4, scoped, tag = 'scoped memory for tpu_custom_call.1']
    #allocation4 [shape = 's32[1]{0}', space=sflag, size = 0x4, scoped, tag = 'scoped memory for tpu_custom_call.1']
    #allocation5 [shape = 'u8[81920]{0}', space=vmem, size = 0x14000, scoped, tag = 'input window, operand 1, single buffered']
    #allocation6 [shape = 's32[1]{0}', space=sflag, size = 0x4, scoped, tag = 'scoped memory for tpu_custom_call.1']
    #allocation7 [shape = 'u8[4096]{0}', space=vmem, size = 0x1000, scoped, tag = 'input window, operand 2, single buffered']
    #allocation8 [shape = 'u8[32768]{0}', space=vmem, size = 0x8000, scoped, tag = 'input window, operand 3, single buffered']
    #allocation9 [shape = 's32[1]{0}', space=sflag, size = 0x4, scoped, tag = 'scoped memory for tpu_custom_call.1']
    #allocation10 [shape = 'u8[8192]{0}', space=vmem, size = 0x2000, scoped, tag = 'output window, operand 0, single buffered']
    %9 = vsyncpa [#allocation3], 0
    %10 = vsyncpa [#allocation6], 0
    %11 = vsyncpa [#allocation9], 0
    %12 = vsyncpa [#allocation4], 0
    // Predicated region
    $region2: #{tpu_custom_call.1} parent=1 // pred_check
      _
    $region3: #{tpu_custom_call.1} parent=1 // pred_check_branch
      %14 = sbr.rel (0) target = $region5
    $region4: #{tpu_custom_call.1} parent=1 // pred_region
      %s16 = ssub.s32 256, 256
      %17 = vsyncadd [#allocation3], %s16
      %s18 = sshll.u32 [#allocation2], 4
      %s19 = int_to_ptr.vmem [resolvable:$true] %s18
      %24 = dma.hbm_to_vmem [thread:$0]  %s0, 256, %s19, [#allocation3], 128, 128, 8
    $region5: #{tpu_custom_call.1} parent=1 // pred_fallthru
      _
    // Predicated region
    $region6: #{tpu_custom_call.1} parent=1 // pred_check
      _
    $region7: #{tpu_custom_call.1} parent=1 // pred_check_branch
      %26 = sbr.rel (0) target = $region9
    $region8: #{tpu_custom_call.1} parent=1 // pred_region
      %s28 = ssub.s32 2560, 2560
      %29 = vsyncadd [#allocation6], %s28
      %s30 = sshll.u32 [#allocation5], 4
      %s31 = int_to_ptr.vmem [resolvable:$true] %s30
      %36 = dma.hbm_to_vmem [thread:$0]  %s1, 2560, %s31, [#allocation6], 128, 128, 8
    $region9: #{tpu_custom_call.1} parent=1 // pred_fallthru
      _
    // Predicated region
    $region10: #{tpu_custom_call.1} parent=1 // pred_check
      _
    $region11: #{tpu_custom_call.1} parent=1 // pred_check_branch
      %38 = sbr.rel (0) target = $region13
    $region12: #{tpu_custom_call.1} parent=1 // pred_region
      %s40 = ssub.s32 128, 128
      %41 = vsyncadd [#allocation6], %s40
      %s43 = sshll.u32 [#allocation7], 4
      %s44 = int_to_ptr.vmem [resolvable:$true] %s43
      %46 = dma.hbm_to_vmem [thread:$0]  %s2, 128, %s44, [#allocation6]
    $region13: #{tpu_custom_call.1} parent=1 // pred_fallthru
      _
    // Predicated region
    $region14: #{tpu_custom_call.1} parent=1 // pred_check
      _
    $region15: #{tpu_custom_call.1} parent=1 // pred_check_branch
      %48 = sbr.rel (0) target = $region17
    $region16: #{tpu_custom_call.1} parent=1 // pred_region
      %s50 = ssub.s32 1024, 1024
      %51 = vsyncadd [#allocation9], %s50
      %s52 = sshll.u32 [#allocation8], 4
      %s53 = int_to_ptr.vmem [resolvable:$true] %s52
      %58 = dma.hbm_to_vmem [thread:$0]  %s3, 1024, %s53, [#allocation9], 128, 128, 8
    $region17: #{tpu_custom_call.1} parent=1 // pred_fallthru
      _
    // Predicated region
    $region18: #{tpu_custom_call.1} parent=1 // pred_check
      _
    $region19: #{tpu_custom_call.1} parent=1 // pred_check_branch
      %60 = sbr.rel (0) target = $region21
    $region20: #{tpu_custom_call.1} parent=1 // pred_region
      %61 = dma.done [#allocation3], 256
    $region21: #{tpu_custom_call.1} parent=1 // pred_fallthru
      _
    // Predicated region
    $region22: #{tpu_custom_call.1} parent=1 // pred_check
      _
    $region23: #{tpu_custom_call.1} parent=1 // pred_check_branch
      %63 = sbr.rel (0) target = $region25
    $region24: #{tpu_custom_call.1} parent=1 // pred_region
      %64 = dma.done [#allocation6], 2560
    $region25: #{tpu_custom_call.1} parent=1 // pred_fallthru
      _
    // Predicated region
    $region26: #{tpu_custom_call.1} parent=1 // pred_check
      _
    $region27: #{tpu_custom_call.1} parent=1 // pred_check_branch
      %66 = sbr.rel (0) target = $region29
    $region28: #{tpu_custom_call.1} parent=1 // pred_region
      %67 = dma.done [#allocation6], 128
    $region29: #{tpu_custom_call.1} parent=1 // pred_fallthru
      _
    // Predicated region
    $region30: #{tpu_custom_call.1} parent=1 // pred_check
      _
    $region31: #{tpu_custom_call.1} parent=1 // pred_check_branch
      %69 = sbr.rel (0) target = $region33
    $region32: #{tpu_custom_call.1} parent=1 // pred_region
      %70 = dma.done [#allocation9], 1024
    $region33: #{tpu_custom_call.1} parent=1 // pred_fallthru
      _
    %v71 = vld [vmem:[#allocation2] sm:$0xff]
    %v72 = vld [vmem:[#allocation2 + $0x8] sm:$0xff]
    %v73 = vld [vmem:[#allocation8] sm:$0xff]
    %v74 = vld [vmem:[#allocation8 + $0x8] sm:$0xff]
    %v75 = vld [vmem:[#allocation8 + $0x10] sm:$0xff]
    %v76 = vld [vmem:[#allocation8 + $0x18] sm:$0xff]
    %v77 = vld [vmem:[#allocation8 + $0x20] sm:$0xff]
    %v78 = vld [vmem:[#allocation8 + $0x28] sm:$0xff]
    %v79 = vld [vmem:[#allocation8 + $0x30] sm:$0xff]
    %v80 = vld [vmem:[#allocation8 + $0x38] sm:$0xff]
    %v81 = vld [vmem:[#allocation5] sm:$0xff]
    %v82 = vld [vmem:[#allocation5 + $0x8] sm:$0xff]
    %v83 = vld [vmem:[#allocation5 + $0x10] sm:$0xff]
    %v84 = vld [vmem:[#allocation5 + $0x18] sm:$0xff]
    %v85 = vld [vmem:[#allocation5 + $0x20] sm:$0xff]
    %v86 = vld [vmem:[#allocation5 + $0x28] sm:$0xff]
    %v87 = vld [vmem:[#allocation5 + $0x30] sm:$0xff]
    %v88 = vld [vmem:[#allocation5 + $0x38] sm:$0xff]
    %v89 = vld [vmem:[#allocation5 + $0x40] sm:$0xff]
    %v90 = vld [vmem:[#allocation5 + $0x48] sm:$0xff]
    %v91 = vld [vmem:[#allocation5 + $0x50] sm:$0xff]
    %v92 = vld [vmem:[#allocation5 + $0x58] sm:$0xff]
    %v93 = vld [vmem:[#allocation5 + $0x60] sm:$0xff]
    %v94 = vld [vmem:[#allocation5 + $0x68] sm:$0xff]
    %v95 = vld [vmem:[#allocation5 + $0x70] sm:$0xff]
    %v96 = vld [vmem:[#allocation5 + $0x78] sm:$0xff]
    %v97 = vld [vmem:[#allocation5 + $0x80] sm:$0xff]
    %v98 = vld [vmem:[#allocation5 + $0x88] sm:$0xff]
    %v99 = vld [vmem:[#allocation5 + $0x90] sm:$0xff]
    %v100 = vld [vmem:[#allocation5 + $0x98] sm:$0xff]
    %v101 = vld [vmem:[#allocation7] sm:$0xff]
    %vm102 = vcmask 261120
    %v103 = vsel %vm102, %v71, 0.0
    %104 = vadd.xlane.f32.xlu0 %v103
    %v105 = vpop.xlane.xlu0 %104
    %v106 = vsel %vm102, %v72, 0.0
    %107 = vadd.xlane.f32.xlu0 %v106
    %v108 = vpop.xlane.xlu0 %107
    %v109 = vrcp.pop 32.0
    %v110 = vmul.f32 %v105, %v109
    %v111 = vmul.f32 %v108, %v109
    %v112 = vsub.f32 %v71, %v110
    %v113 = vsub.f32 %v72, %v111
    %v114 = vmul.f32 %v112, %v112
    %v115 = vmul.f32 %v113, %v113
    %v116 = vsel %vm102, %v114, 0.0
    %117 = vadd.xlane.f32.xlu0 %v116
    %v118 = vpop.xlane.xlu0 %117
    %v119 = vsel %vm102, %v115, 0.0
    %120 = vadd.xlane.f32.xlu0 %v119
    %v121 = vpop.xlane.xlu0 %120
    %v122 = vmul.f32 %v118, %v109
    %v123 = vmul.f32 %v121, %v109
    %v124 = vadd.f32 %v122, 1e-06
    %v125 = vadd.f32 %v123, 1e-06
    %v126 = vrsqrt.pop %v124
    %v127 = vrsqrt.pop %v125
    %v128 = vmul.f32 %v112, %v126
    %v129 = vmul.f32 %v113, %v127
    %v130 = vlaneseq
    %v131 = vshrl.u32 %v130, 7
    %v132 = vsub.s32 0, %v131
    %v133 = vrot.slane %v101, %v132
    %v134 = vmul.f32 %v128, %v133
    %v135 = vmul.f32 %v129, %v133
    %v136 = vlaneseq
    %v137 = vshrl.u32 %v136, 7
    %v138 = vsub.s32 1, %v137
    %v139 = vrot.slane %v101, %v138
    %v140 = vadd.f32 %v134, %v139
    %v141 = vadd.f32 %v135, %v139
    %v142 = vlaneseq
    %v143 = vshrl.u32 %v142, 7
    %v144 = vsub.s32 2, %v143
    %v145 = vrot.slane %v101, %v144
    %v147 = vsel %vm102, %v140, 0
    %v150 = vsel %vm102, %v141, 0
    %152 = vmatprep.subr.mxu0 0.0
    %153 = vmatpush1.msra.mxu0 %v81
    %154 = vmatprep.subr.mxu0 0.0
    %155 = vmatpush1.msra.mxu0 %v82
    %156 = vmatprep.subr.mxu0 0.0
    %157 = vmatpush1.msra.mxu0 %v83
    %158 = vmatprep.subr.mxu0 0.0
    %159 = vmatpush1.msra.mxu0 %v84
    %160 = vmatprep.subr.mxu0 0.0
    %161 = vmatpush1.msra.mxu0 0.0
    %162 = vmatprep.subr.mxu0 0.0
    %163 = vmatpush1.msra.mxu0 0.0
    %164 = vmatprep.subr.mxu0 0.0
    %165 = vmatpush1.msra.mxu0 0.0
    %166 = vmatprep.subr.mxu0 0.0
    %167 = vmatpush1.msra.mxu0 0.0
    %168 = vmatprep.subr.mxu0 0.0
    %169 = vmatpush1.msra.mxu0 0.0
    %170 = vmatprep.subr.mxu0 0.0
    %171 = vmatpush1.msra.mxu0 0.0
    %172 = vmatprep.subr.mxu0 0.0
    %173 = vmatpush1.msra.mxu0 0.0
    %174 = vmatprep.subr.mxu0 0.0
    %175 = vmatpush1.msra.mxu0 0.0
    %176 = vmatprep.subr.mxu0 0.0
    %177 = vmatpush1.msra.mxu0 0.0
    %178 = vmatprep.subr.mxu0 0.0
    %179 = vmatpush1.msra.mxu0 0.0
    %180 = vmatprep.subr.mxu0 0.0
    %181 = vmatpush1.msra.mxu0 0.0
    %182 = vmatprep.subr.mxu0 0.0
    %183 = vmatpush1.msra.mxu0 0.0
    %184 = vmatprep.subr.mxu0 0.0
    %185 = vmatpush1.msra.mxu0 0.0
    %186 = vmatprep.subr.mxu0 0.0
    %187 = vmatpush1.msra.mxu0 0.0
    %188 = vmatprep.subr.mxu0 0.0
    %189 = vmatpush1.msra.mxu0 0.0
    %190 = vmatprep.subr.mxu0 0.0
    %191 = vmatpush1.msra.mxu0 0.0
    %192 = vmatprep.subr.mxu0 0.0
    %193 = vmatpush1.msra.mxu0 0.0
    %194 = vmatprep.subr.mxu0 0.0
    %195 = vmatpush1.msra.mxu0 0.0
    %196 = vmatprep.subr.mxu0 0.0
    %197 = vmatpush1.msra.mxu0 0.0
    %198 = vmatprep.subr.mxu0 0.0
    %199 = vmatpush1.msra.mxu0 0.0
    %200 = vmatprep.subr.mxu0 0.0
    %201 = vmatpush1.msra.mxu0 0.0
    %202 = vmatprep.subr.mxu0 0.0
    %203 = vmatpush1.msra.mxu0 0.0
    %204 = vmatprep.subr.mxu0 0.0
    %205 = vmatpush1.msra.mxu0 0.0
    %206 = vmatprep.subr.mxu0 0.0
    %207 = vmatpush1.msra.mxu0 0.0
    %208 = vmatprep.subr.mxu0 0.0
    %209 = vmatpush1.msra.mxu0 0.0
    %210 = vmatprep.subr.mxu0 0.0
    %211 = vmatpush1.msra.mxu0 0.0
    %212 = vmatprep.subr.mxu0 0.0
    %213 = vmatpush1.msra.mxu0 0.0
    %214 = vmatprep.subr.mxu0 0.0
    %215 = vmatpush1.msra.mxu0 0.0
    %216 = vmatprep.mubr.f32.mxu0 0.0
    %217 = vmatmul.mubr.f32.gmra.mrb[0].mxu0 %v147
    %v218 = vpop.f32.mrb[0].mxu0
    %v219 = vadd.f32 %v145, %v218
    %v220 = vpop.f32.mrb[0].mxu0
    %221 = vmatprep.mubr.f32.mxu0 0.0
    %222 = vmatmul.mubr.f32.gmra.mrb[0].mxu0 %v150
    %v223 = vpop.f32.mrb[0].mxu0
    %v224 = vadd.f32 %v145, %v223
    %v225 = vpop.f32.mrb[0].mxu0
    %226 = vdwg.mxu0
    %229 = vrot.lane.b32.xlu0 %v219, 104
    %v230 = vpop.permute.xlu0 %229
    %231 = vrot.lane.b32.xlu0 %v224, 104
    %v232 = vpop.permute.xlu0 %231
    %233 = vrot.lane.b32.xlu0 %v219, 80
    %v234 = vpop.permute.xlu0 %233
    %235 = vrot.lane.b32.xlu0 %v224, 80
    %v236 = vpop.permute.xlu0 %235
    %237 = vrot.lane.b32.xlu0 %v219, 56
    %v238 = vpop.permute.xlu0 %237
    %239 = vrot.lane.b32.xlu0 %v224, 56
    %v240 = vpop.permute.xlu0 %239
    %241 = vrot.lane.b32.xlu0 %v219, 120
    %v242 = vpop.permute.xlu0 %241
    %243 = vrot.lane.b32.xlu0 %v224, 120
    %v244 = vpop.permute.xlu0 %243
    %245 = vrot.lane.b32.xlu0 %v230, 120
    %v246 = vpop.permute.xlu0 %245
    %247 = vrot.lane.b32.xlu0 %v232, 120
    %v248 = vpop.permute.xlu0 %247
    %249 = vrot.lane.b32.xlu0 %v234, 120
    %v250 = vpop.permute.xlu0 %249
    %251 = vrot.lane.b32.xlu0 %v236, 120
    %v252 = vpop.permute.xlu0 %251
    %253 = vrot.lane.b32.xlu0 %v238, 120
    %v254 = vpop.permute.xlu0 %253
    %255 = vrot.lane.b32.xlu0 %v240, 120
    %v256 = vpop.permute.xlu0 %255
    %vm257 = vcmask 64512
    %v258 = vsel %vm257, %v219, 0
    %v260 = vsel %vm257, %v224, 0
    %v262 = vsel %vm257, %v230, 0
    %v264 = vsel %vm257, %v232, 0
    %v266 = vsel %vm257, %v234, 0
    %v268 = vsel %vm257, %v236, 0
    %v270 = vsel %vm257, %v238, 0
    %v272 = vsel %vm257, %v240, 0
    %v274 = vsel %vm257, %v242, 0
    %v276 = vsel %vm257, %v244, 0
    %v278 = vsel %vm257, %v246, 0
    %v280 = vsel %vm257, %v248, 0
    %v282 = vsel %vm257, %v250, 0
    %v284 = vsel %vm257, %v252, 0
    %v286 = vsel %vm257, %v254, 0
    %v288 = vsel %vm257, %v256, 0
    %290 = vmatprep.subr.mxu0 0.0
    %291 = vmatpush1.xpose.msra.mxu0 %v274
    %292 = vmatprep.subr.mxu0 0.0
    %293 = vmatpush1.xpose.msra.mxu0 %v276
    %294 = vmatprep.subr.mxu0 0.0
    %295 = vmatpush1.xpose.msra.mxu0 %v278
    %296 = vmatprep.subr.mxu0 0.0
    %297 = vmatpush1.xpose.msra.mxu0 %v280
    %298 = vmatprep.subr.mxu0 0.0
    %299 = vmatpush1.xpose.msra.mxu0 %v282
    %300 = vmatprep.subr.mxu0 0.0
    %301 = vmatpush1.xpose.msra.mxu0 %v284
    %302 = vmatprep.subr.mxu0 0.0
    %303 = vmatpush1.xpose.msra.mxu0 %v286
    %304 = vmatprep.subr.mxu0 0.0
    %305 = vmatpush1.xpose.msra.mxu0 %v288
    %306 = vmatprep.subr.mxu0 0.0
    %307 = vmatpush1.xpose.msra.mxu0 0.0
    %308 = vmatprep.subr.mxu0 0.0
    %309 = vmatpush1.xpose.msra.mxu0 0.0
    %310 = vmatprep.subr.mxu0 0.0
    %311 = vmatpush1.xpose.msra.mxu0 0.0
    %312 = vmatprep.subr.mxu0 0.0
    %313 = vmatpush1.xpose.msra.mxu0 0.0
    %314 = vmatprep.subr.mxu0 0.0
    %315 = vmatpush1.xpose.msra.mxu0 0.0
    %316 = vmatprep.subr.mxu0 0.0
    %317 = vmatpush1.xpose.msra.mxu0 0.0
    %318 = vmatprep.subr.mxu0 0.0
    %319 = vmatpush1.xpose.msra.mxu0 0.0
    %320 = vmatprep.subr.mxu0 0.0
    %321 = vmatpush1.xpose.msra.mxu0 0.0
    %322 = vmatprep.subr.mxu0 0.0
    %323 = vmatpush1.xpose.msra.mxu0 0.0
    %324 = vmatprep.subr.mxu0 0.0
    %325 = vmatpush1.xpose.msra.mxu0 0.0
    %326 = vmatprep.subr.mxu0 0.0
    %327 = vmatpush1.xpose.msra.mxu0 0.0
    %328 = vmatprep.subr.mxu0 0.0
    %329 = vmatpush1.xpose.msra.mxu0 0.0
    %330 = vmatprep.subr.mxu0 0.0
    %331 = vmatpush1.xpose.msra.mxu0 0.0
    %332 = vmatprep.subr.mxu0 0.0
    %333 = vmatpush1.xpose.msra.mxu0 0.0
    %334 = vmatprep.subr.mxu0 0.0
    %335 = vmatpush1.xpose.msra.mxu0 0.0
    %336 = vmatprep.subr.mxu0 0.0
    %337 = vmatpush1.xpose.msra.mxu0 0.0
    %338 = vmatprep.subr.mxu0 0.0
    %339 = vmatpush1.xpose.msra.mxu0 0.0
    %340 = vmatprep.subr.mxu0 0.0
    %341 = vmatpush1.xpose.msra.mxu0 0.0
    %342 = vmatprep.subr.mxu0 0.0
    %343 = vmatpush1.xpose.msra.mxu0 0.0
    %344 = vmatprep.subr.mxu0 0.0
    %345 = vmatpush1.xpose.msra.mxu0 0.0
    %346 = vmatprep.subr.mxu0 0.0
    %347 = vmatpush1.xpose.msra.mxu0 0.0
    %348 = vmatprep.subr.mxu0 0.0
    %349 = vmatpush1.xpose.msra.mxu0 0.0
    %350 = vmatprep.subr.mxu0 0.0
    %351 = vmatpush1.xpose.msra.mxu0 0.0
    %352 = vmatprep.subr.mxu0 0.0
    %353 = vmatpush1.xpose.msra.mxu0 0.0
    %354 = vmatprep.mubr.f32.mxu0 0.0
    %355 = vmatmul.mubr.f32.gmra.mrb[0].mxu0 %v258
    %v356 = vpop.f32.mrb[0].mxu0
    %v357 = vadd.f32 0.0, %v356
    %v358 = vpop.f32.mrb[0].mxu0
    %359 = vmatprep.mubr.f32.mxu0 0.0
    %360 = vmatmul.mubr.f32.gmra.mrb[0].mxu0 %v260
    %v361 = vpop.f32.mrb[0].mxu0
    %v362 = vadd.f32 0.0, %v361
    %v363 = vpop.f32.mrb[0].mxu0
    %364 = vmatprep.mubr.f32.mxu0 0.0
    %365 = vmatmul.mubr.f32.gmra.mrb[0].mxu0 %v262
    %v366 = vpop.f32.mrb[0].mxu0
    %v367 = vadd.f32 0.0, %v366
    %v368 = vpop.f32.mrb[0].mxu0
    %369 = vmatprep.mubr.f32.mxu0 0.0
    %370 = vmatmul.mubr.f32.gmra.mrb[0].mxu0 %v264
    %v371 = vpop.f32.mrb[0].mxu0
    %v372 = vadd.f32 0.0, %v371
    %v373 = vpop.f32.mrb[0].mxu0
    %374 = vmatprep.mubr.f32.mxu0 0.0
    %375 = vmatmul.mubr.f32.gmra.mrb[0].mxu0 %v266
    %v376 = vpop.f32.mrb[0].mxu0
    %v377 = vadd.f32 0.0, %v376
    %v378 = vpop.f32.mrb[0].mxu0
    %379 = vmatprep.mubr.f32.mxu0 0.0
    %380 = vmatmul.mubr.f32.gmra.mrb[0].mxu0 %v268
    %v381 = vpop.f32.mrb[0].mxu0
    %v382 = vadd.f32 0.0, %v381
    %v383 = vpop.f32.mrb[0].mxu0
    %384 = vmatprep.mubr.f32.mxu0 0.0
    %385 = vmatmul.mubr.f32.gmra.mrb[0].mxu0 %v270
    %v386 = vpop.f32.mrb[0].mxu0
    %v387 = vadd.f32 0.0, %v386
    %v388 = vpop.f32.mrb[0].mxu0
    %389 = vmatprep.mubr.f32.mxu0 0.0
    %390 = vmatmul.mubr.f32.gmra.mrb[0].mxu0 %v272
    %v391 = vpop.f32.mrb[0].mxu0
    %v392 = vadd.f32 0.0, %v391
    %v393 = vpop.f32.mrb[0].mxu0
    %394 = vdwg.mxu0
    %v395 = vmul.f32 %v357, 0.35355338
    %v396 = vmul.f32 %v362, 0.35355338
    %v397 = vmul.f32 %v367, 0.35355338
    %v398 = vmul.f32 %v372, 0.35355338
    %v399 = vmul.f32 %v377, 0.35355338
    %v400 = vmul.f32 %v382, 0.35355338
    %v401 = vmul.f32 %v387, 0.35355338
    %v402 = vmul.f32 %v392, 0.35355338
    %v403 = vadd.f32 %v395, %v73
    %v404 = vadd.f32 %v396, %v74
    %v405 = vadd.f32 %v397, %v75
    %v406 = vadd.f32 %v398, %v76
    %v407 = vadd.f32 %v399, %v77
    %v408 = vadd.f32 %v400, %v78
    %v409 = vadd.f32 %v401, %v79
    %v410 = vadd.f32 %v402, %v80
    %vm411 = vcmask 523264
    %v412 = vsel %vm411, %v403, -inf
    %413 = vmax.xlane.f32.xlu0 %v412
    %v414 = vpop.xlane.xlu0 %413
    %v415 = vsel %vm411, %v404, -inf
    %416 = vmax.xlane.f32.xlu0 %v415
    %v417 = vpop.xlane.xlu0 %416
    %v418 = vsel %vm411, %v405, -inf
    %419 = vmax.xlane.f32.xlu0 %v418
    %v420 = vpop.xlane.xlu0 %419
    %v421 = vsel %vm411, %v406, -inf
    %422 = vmax.xlane.f32.xlu0 %v421
    %v423 = vpop.xlane.xlu0 %422
    %v424 = vsel %vm411, %v407, -inf
    %425 = vmax.xlane.f32.xlu0 %v424
    %v426 = vpop.xlane.xlu0 %425
    %v427 = vsel %vm411, %v408, -inf
    %428 = vmax.xlane.f32.xlu0 %v427
    %v429 = vpop.xlane.xlu0 %428
    %v430 = vsel %vm411, %v409, -inf
    %431 = vmax.xlane.f32.xlu0 %v430
    %v432 = vpop.xlane.xlu0 %431
    %v433 = vsel %vm411, %v410, -inf
    %434 = vmax.xlane.f32.xlu0 %v433
    %v435 = vpop.xlane.xlu0 %434
    %v436 = vsub.f32 %v403, %v414
    %v437 = vsub.f32 %v404, %v417
    %v438 = vsub.f32 %v405, %v420
    %v439 = vsub.f32 %v406, %v423
    %v440 = vsub.f32 %v407, %v426
    %v441 = vsub.f32 %v408, %v429
    %v442 = vsub.f32 %v409, %v432
    %v443 = vsub.f32 %v410, %v435
    %v444 = vmul.f32 %v436, 1.442695
    %v445 = vpow.pop %v444
    %v446 = vmul.f32 %v437, 1.442695
    %v447 = vpow.pop %v446
    %v448 = vmul.f32 %v438, 1.442695
    %v449 = vpow.pop %v448
    %v450 = vmul.f32 %v439, 1.442695
    %v451 = vpow.pop %v450
    %v452 = vmul.f32 %v440, 1.442695
    %v453 = vpow.pop %v452
    %v454 = vmul.f32 %v441, 1.442695
    %v455 = vpow.pop %v454
    %v456 = vmul.f32 %v442, 1.442695
    %v457 = vpow.pop %v456
    %v458 = vmul.f32 %v443, 1.442695
    %v459 = vpow.pop %v458
    %v460 = vsel %vm411, %v445, 0.0
    %461 = vadd.xlane.f32.xlu0 %v460
    %v462 = vpop.xlane.xlu0 %461
    %v463 = vsel %vm411, %v447, 0.0
    %464 = vadd.xlane.f32.xlu0 %v463
    %v465 = vpop.xlane.xlu0 %464
    %v466 = vsel %vm411, %v449, 0.0
    %467 = vadd.xlane.f32.xlu0 %v466
    %v468 = vpop.xlane.xlu0 %467
    %v469 = vsel %vm411, %v451, 0.0
    %470 = vadd.xlane.f32.xlu0 %v469
    %v471 = vpop.xlane.xlu0 %470
    %v472 = vsel %vm411, %v453, 0.0
    %473 = vadd.xlane.f32.xlu0 %v472
    %v474 = vpop.xlane.xlu0 %473
    %v475 = vsel %vm411, %v455, 0.0
    %476 = vadd.xlane.f32.xlu0 %v475
    %v477 = vpop.xlane.xlu0 %476
    %v478 = vsel %vm411, %v457, 0.0
    %479 = vadd.xlane.f32.xlu0 %v478
    %v480 = vpop.xlane.xlu0 %479
    %v481 = vsel %vm411, %v459, 0.0
    %482 = vadd.xlane.f32.xlu0 %v481
    %v483 = vpop.xlane.xlu0 %482
    %v484 = vrcp.pop %v462
    %v485 = vmul.f32 %v445, %v484
    %v486 = vrcp.pop %v465
    %v487 = vmul.f32 %v447, %v486
    %v488 = vrcp.pop %v468
    %v489 = vmul.f32 %v449, %v488
    %v490 = vrcp.pop %v471
    %v491 = vmul.f32 %v451, %v490
    %v492 = vrcp.pop %v474
    %v493 = vmul.f32 %v453, %v492
    %v494 = vrcp.pop %v477
    %v495 = vmul.f32 %v455, %v494
    %v496 = vrcp.pop %v480
    %v497 = vmul.f32 %v457, %v496
    %v498 = vrcp.pop %v483
    %v499 = vmul.f32 %v459, %v498
    %500 = vrot.lane.b32.xlu0 %v219, 112
    %v501 = vpop.permute.xlu0 %500
    %502 = vrot.lane.b32.xlu0 %v224, 112
    %v503 = vpop.permute.xlu0 %502
    %504 = vrot.lane.b32.xlu0 %v230, 112
    %v505 = vpop.permute.xlu0 %504
    %506 = vrot.lane.b32.xlu0 %v232, 112
    %v507 = vpop.permute.xlu0 %506
    %508 = vrot.lane.b32.xlu0 %v234, 112
    %v509 = vpop.permute.xlu0 %508
    %510 = vrot.lane.b32.xlu0 %v236, 112
    %v511 = vpop.permute.xlu0 %510
    %512 = vrot.lane.b32.xlu0 %v238, 112
    %v513 = vpop.permute.xlu0 %512
    %514 = vrot.lane.b32.xlu0 %v240, 112
    %v515 = vpop.permute.xlu0 %514
    %v525 = vsel %vm411, %v485, 0
    %v528 = vsel %vm411, %v487, 0
    %v531 = vsel %vm411, %v489, 0
    %v534 = vsel %vm411, %v491, 0
    %v537 = vsel %vm411, %v493, 0
    %v540 = vsel %vm411, %v495, 0
    %v543 = vsel %vm411, %v497, 0
    %v546 = vsel %vm411, %v499, 0
    %548 = vmatprep.subr.mxu0 0.0
    %549 = vmatpush1.msra.mxu0 %v501
    %550 = vmatprep.subr.mxu0 0.0
    %551 = vmatpush1.msra.mxu0 %v503
    %552 = vmatprep.subr.mxu0 0.0
    %553 = vmatpush1.msra.mxu0 %v505
    %554 = vmatprep.subr.mxu0 0.0
    %555 = vmatpush1.msra.mxu0 %v507
    %556 = vmatprep.subr.mxu0 0.0
    %557 = vmatpush1.msra.mxu0 %v509
    %558 = vmatprep.subr.mxu0 0.0
    %559 = vmatpush1.msra.mxu0 %v511
    %560 = vmatprep.subr.mxu0 0.0
    %561 = vmatpush1.msra.mxu0 %v513
    %562 = vmatprep.subr.mxu0 0.0
    %563 = vmatpush1.msra.mxu0 %v515
    %564 = vmatprep.subr.mxu0 0.0
    %565 = vmatpush1.msra.mxu0 0.0
    %566 = vmatprep.subr.mxu0 0.0
    %567 = vmatpush1.msra.mxu0 0.0
    %568 = vmatprep.subr.mxu0 0.0
    %569 = vmatpush1.msra.mxu0 0.0
    %570 = vmatprep.subr.mxu0 0.0
    %571 = vmatpush1.msra.mxu0 0.0
    %572 = vmatprep.subr.mxu0 0.0
    %573 = vmatpush1.msra.mxu0 0.0
    %574 = vmatprep.subr.mxu0 0.0
    %575 = vmatpush1.msra.mxu0 0.0
    %576 = vmatprep.subr.mxu0 0.0
    %577 = vmatpush1.msra.mxu0 0.0
    %578 = vmatprep.subr.mxu0 0.0
    %579 = vmatpush1.msra.mxu0 0.0
    %580 = vmatprep.subr.mxu0 0.0
    %581 = vmatpush1.msra.mxu0 0.0
    %582 = vmatprep.subr.mxu0 0.0
    %583 = vmatpush1.msra.mxu0 0.0
    %584 = vmatprep.subr.mxu0 0.0
    %585 = vmatpush1.msra.mxu0 0.0
    %586 = vmatprep.subr.mxu0 0.0
    %587 = vmatpush1.msra.mxu0 0.0
    %588 = vmatprep.subr.mxu0 0.0
    %589 = vmatpush1.msra.mxu0 0.0
    %590 = vmatprep.subr.mxu0 0.0
    %591 = vmatpush1.msra.mxu0 0.0
    %592 = vmatprep.subr.mxu0 0.0
    %593 = vmatpush1.msra.mxu0 0.0
    %594 = vmatprep.subr.mxu0 0.0
    %595 = vmatpush1.msra.mxu0 0.0
    %596 = vmatprep.subr.mxu0 0.0
    %597 = vmatpush1.msra.mxu0 0.0
    %598 = vmatprep.subr.mxu0 0.0
    %599 = vmatpush1.msra.mxu0 0.0
    %600 = vmatprep.subr.mxu0 0.0
    %601 = vmatpush1.msra.mxu0 0.0
    %602 = vmatprep.subr.mxu0 0.0
    %603 = vmatpush1.msra.mxu0 0.0
    %604 = vmatprep.subr.mxu0 0.0
    %605 = vmatpush1.msra.mxu0 0.0
    %606 = vmatprep.subr.mxu0 0.0
    %607 = vmatpush1.msra.mxu0 0.0
    %608 = vmatprep.subr.mxu0 0.0
    %609 = vmatpush1.msra.mxu0 0.0
    %610 = vmatprep.subr.mxu0 0.0
    %611 = vmatpush1.msra.mxu0 0.0
    %612 = vmatprep.mubr.f32.mxu0 0.0
    %613 = vmatmul.mubr.f32.gmra.mrb[0].mxu0 %v525
    %v614 = vpop.f32.mrb[0].mxu0
    %v615 = vadd.f32 0.0, %v614
    %v616 = vpop.f32.mrb[0].mxu0
    %617 = vmatprep.mubr.f32.mxu0 0.0
    %618 = vmatmul.mubr.f32.gmra.mrb[0].mxu0 %v528
    %v619 = vpop.f32.mrb[0].mxu0
    %v620 = vadd.f32 0.0, %v619
    %v621 = vpop.f32.mrb[0].mxu0
    %622 = vmatprep.mubr.f32.mxu0 0.0
    %623 = vmatmul.mubr.f32.gmra.mrb[0].mxu0 %v531
    %v624 = vpop.f32.mrb[0].mxu0
    %v625 = vadd.f32 0.0, %v624
    %v626 = vpop.f32.mrb[0].mxu0
    %627 = vmatprep.mubr.f32.mxu0 0.0
    %628 = vmatmul.mubr.f32.gmra.mrb[0].mxu0 %v534
    %v629 = vpop.f32.mrb[0].mxu0
    %v630 = vadd.f32 0.0, %v629
    %v631 = vpop.f32.mrb[0].mxu0
    %632 = vmatprep.mubr.f32.mxu0 0.0
    %633 = vmatmul.mubr.f32.gmra.mrb[0].mxu0 %v537
    %v634 = vpop.f32.mrb[0].mxu0
    %v635 = vadd.f32 0.0, %v634
    %v636 = vpop.f32.mrb[0].mxu0
    %637 = vmatprep.mubr.f32.mxu0 0.0
    %638 = vmatmul.mubr.f32.gmra.mrb[0].mxu0 %v540
    %v639 = vpop.f32.mrb[0].mxu0
    %v640 = vadd.f32 0.0, %v639
    %v641 = vpop.f32.mrb[0].mxu0
    %642 = vmatprep.mubr.f32.mxu0 0.0
    %643 = vmatmul.mubr.f32.gmra.mrb[0].mxu0 %v543
    %v644 = vpop.f32.mrb[0].mxu0
    %v645 = vadd.f32 0.0, %v644
    %v646 = vpop.f32.mrb[0].mxu0
    %647 = vmatprep.mubr.f32.mxu0 0.0
    %648 = vmatmul.mubr.f32.gmra.mrb[0].mxu0 %v546
    %v649 = vpop.f32.mrb[0].mxu0
    %v650 = vadd.f32 0.0, %v649
    %v651 = vpop.f32.mrb[0].mxu0
    %652 = vdwg.mxu0
    %655 = vrot.lane.b32.xlu0 %v625, 8
    %v656 = vpop.permute.xlu0 %655
    %657 = vrot.lane.b32.xlu0 %v630, 8
    %v658 = vpop.permute.xlu0 %657
    %663 = vrot.lane.b32.xlu0 %v635, 16
    %v664 = vpop.permute.xlu0 %663
    %665 = vrot.lane.b32.xlu0 %v640, 16
    %v666 = vpop.permute.xlu0 %665
    %671 = vrot.lane.b32.xlu0 %v645, 24
    %v672 = vpop.permute.xlu0 %671
    %673 = vrot.lane.b32.xlu0 %v650, 24
    %v674 = vpop.permute.xlu0 %673
    %v677 = vsel %vm257, %v615, %v656
    %v678 = vsel %vm257, %v620, %v658
    %vm679 = vcmask 130048
    %v680 = vsel %vm679, %v677, %v664
    %v681 = vsel %vm679, %v678, %v666
    %vm682 = vcmask 195584
    %v683 = vsel %vm682, %v680, %v672
    %v684 = vsel %vm682, %v681, %v674
    %v685 = vlaneseq
    %v686 = vshrl.u32 %v685, 7
    %v687 = vsub.s32 3, %v686
    %v688 = vrot.slane %v101, %v687
    %v690 = vsel %vm102, %v683, 0
    %v693 = vsel %vm102, %v684, 0
    %695 = vmatprep.subr.mxu0 0.0
    %696 = vmatpush1.msra.mxu0 %v85
    %697 = vmatprep.subr.mxu0 0.0
    %698 = vmatpush1.msra.mxu0 %v86
    %699 = vmatprep.subr.mxu0 0.0
    %700 = vmatpush1.msra.mxu0 %v87
    %701 = vmatprep.subr.mxu0 0.0
    %702 = vmatpush1.msra.mxu0 %v88
    %703 = vmatprep.subr.mxu0 0.0
    %704 = vmatpush1.msra.mxu0 0.0
    %705 = vmatprep.subr.mxu0 0.0
    %706 = vmatpush1.msra.mxu0 0.0
    %707 = vmatprep.subr.mxu0 0.0
    %708 = vmatpush1.msra.mxu0 0.0
    %709 = vmatprep.subr.mxu0 0.0
    %710 = vmatpush1.msra.mxu0 0.0
    %711 = vmatprep.subr.mxu0 0.0
    %712 = vmatpush1.msra.mxu0 0.0
    %713 = vmatprep.subr.mxu0 0.0
    %714 = vmatpush1.msra.mxu0 0.0
    %715 = vmatprep.subr.mxu0 0.0
    %716 = vmatpush1.msra.mxu0 0.0
    %717 = vmatprep.subr.mxu0 0.0
    %718 = vmatpush1.msra.mxu0 0.0
    %719 = vmatprep.subr.mxu0 0.0
    %720 = vmatpush1.msra.mxu0 0.0
    %721 = vmatprep.subr.mxu0 0.0
    %722 = vmatpush1.msra.mxu0 0.0
    %723 = vmatprep.subr.mxu0 0.0
    %724 = vmatpush1.msra.mxu0 0.0
    %725 = vmatprep.subr.mxu0 0.0
    %726 = vmatpush1.msra.mxu0 0.0
    %727 = vmatprep.subr.mxu0 0.0
    %728 = vmatpush1.msra.mxu0 0.0
    %729 = vmatprep.subr.mxu0 0.0
    %730 = vmatpush1.msra.mxu0 0.0
    %731 = vmatprep.subr.mxu0 0.0
    %732 = vmatpush1.msra.mxu0 0.0
    %733 = vmatprep.subr.mxu0 0.0
    %734 = vmatpush1.msra.mxu0 0.0
    %735 = vmatprep.subr.mxu0 0.0
    %736 = vmatpush1.msra.mxu0 0.0
    %737 = vmatprep.subr.mxu0 0.0
    %738 = vmatpush1.msra.mxu0 0.0
    %739 = vmatprep.subr.mxu0 0.0
    %740 = vmatpush1.msra.mxu0 0.0
    %741 = vmatprep.subr.mxu0 0.0
    %742 = vmatpush1.msra.mxu0 0.0
    %743 = vmatprep.subr.mxu0 0.0
    %744 = vmatpush1.msra.mxu0 0.0
    %745 = vmatprep.subr.mxu0 0.0
    %746 = vmatpush1.msra.mxu0 0.0
    %747 = vmatprep.subr.mxu0 0.0
    %748 = vmatpush1.msra.mxu0 0.0
    %749 = vmatprep.subr.mxu0 0.0
    %750 = vmatpush1.msra.mxu0 0.0
    %751 = vmatprep.subr.mxu0 0.0
    %752 = vmatpush1.msra.mxu0 0.0
    %753 = vmatprep.subr.mxu0 0.0
    %754 = vmatpush1.msra.mxu0 0.0
    %755 = vmatprep.subr.mxu0 0.0
    %756 = vmatpush1.msra.mxu0 0.0
    %757 = vmatprep.subr.mxu0 0.0
    %758 = vmatpush1.msra.mxu0 0.0
    %759 = vmatprep.mubr.f32.mxu0 0.0
    %760 = vmatmul.mubr.f32.gmra.mrb[0].mxu0 %v690
    %v761 = vpop.f32.mrb[0].mxu0
    %v762 = vadd.f32 %v688, %v761
    %v763 = vpop.f32.mrb[0].mxu0
    %764 = vmatprep.mubr.f32.mxu0 0.0
    %765 = vmatmul.mubr.f32.gmra.mrb[0].mxu0 %v693
    %v766 = vpop.f32.mrb[0].mxu0
    %v767 = vadd.f32 %v688, %v766
    %v768 = vpop.f32.mrb[0].mxu0
    %769 = vdwg.mxu0
    %v770 = vadd.f32 %v762, %v71
    %v771 = vadd.f32 %v767, %v72
    %v772 = vsel %vm102, %v770, 0.0
    %773 = vadd.xlane.f32.xlu0 %v772
    %v774 = vpop.xlane.xlu0 %773
    %v775 = vsel %vm102, %v771, 0.0
    %776 = vadd.xlane.f32.xlu0 %v775
    %v777 = vpop.xlane.xlu0 %776
    %v778 = vmul.f32 %v774, %v109
    %v779 = vmul.f32 %v777, %v109
    %v780 = vsub.f32 %v770, %v778
    %v781 = vsub.f32 %v771, %v779
    %v782 = vmul.f32 %v780, %v780
    %v783 = vmul.f32 %v781, %v781
    %v784 = vsel %vm102, %v782, 0.0
    %785 = vadd.xlane.f32.xlu0 %v784
    %v786 = vpop.xlane.xlu0 %785
    %v787 = vsel %vm102, %v783, 0.0
    %788 = vadd.xlane.f32.xlu0 %v787
    %v789 = vpop.xlane.xlu0 %788
    %v790 = vmul.f32 %v786, %v109
    %v791 = vmul.f32 %v789, %v109
    %v792 = vadd.f32 %v790, 1e-06
    %v793 = vadd.f32 %v791, 1e-06
    %v794 = vrsqrt.pop %v792
    %v795 = vrsqrt.pop %v793
    %v796 = vmul.f32 %v780, %v794
    %v797 = vmul.f32 %v781, %v795
    %v798 = vlaneseq
    %v799 = vshrl.u32 %v798, 7
    %v800 = vsub.s32 4, %v799
    %v801 = vrot.slane %v101, %v800
    %v802 = vmul.f32 %v796, %v801
    %v803 = vmul.f32 %v797, %v801
    %v804 = vlaneseq
    %v805 = vshrl.u32 %v804, 7
    %v806 = vsub.s32 5, %v805
    %v807 = vrot.slane %v101, %v806
    %v808 = vadd.f32 %v802, %v807
    %v809 = vadd.f32 %v803, %v807
    %v810 = vlaneseq
    %v811 = vshrl.u32 %v810, 7
    %v812 = vsub.s32 6, %v811
    %v813 = vrot.slane %v101, %v812
    %v815 = vsel %vm102, %v808, 0
    %v818 = vsel %vm102, %v809, 0
    %820 = vmatprep.subr.mxu0 0.0
    %821 = vmatpush1.msra.mxu0 %v89
    %822 = vmatprep.subr.mxu0 0.0
    %823 = vmatpush1.msra.mxu0 %v90
    %824 = vmatprep.subr.mxu0 0.0
    %825 = vmatpush1.msra.mxu0 %v91
    %826 = vmatprep.subr.mxu0 0.0
    %827 = vmatpush1.msra.mxu0 %v92
    %828 = vmatprep.subr.mxu0 0.0
    %829 = vmatpush1.msra.mxu0 0.0
    %830 = vmatprep.subr.mxu0 0.0
    %831 = vmatpush1.msra.mxu0 0.0
    %832 = vmatprep.subr.mxu0 0.0
    %833 = vmatpush1.msra.mxu0 0.0
    %834 = vmatprep.subr.mxu0 0.0
    %835 = vmatpush1.msra.mxu0 0.0
    %836 = vmatprep.subr.mxu0 0.0
    %837 = vmatpush1.msra.mxu0 0.0
    %838 = vmatprep.subr.mxu0 0.0
    %839 = vmatpush1.msra.mxu0 0.0
    %840 = vmatprep.subr.mxu0 0.0
    %841 = vmatpush1.msra.mxu0 0.0
    %842 = vmatprep.subr.mxu0 0.0
    %843 = vmatpush1.msra.mxu0 0.0
    %844 = vmatprep.subr.mxu0 0.0
    %845 = vmatpush1.msra.mxu0 0.0
    %846 = vmatprep.subr.mxu0 0.0
    %847 = vmatpush1.msra.mxu0 0.0
    %848 = vmatprep.subr.mxu0 0.0
    %849 = vmatpush1.msra.mxu0 0.0
    %850 = vmatprep.subr.mxu0 0.0
    %851 = vmatpush1.msra.mxu0 0.0
    %852 = vmatprep.subr.mxu0 0.0
    %853 = vmatpush1.msra.mxu0 0.0
    %854 = vmatprep.subr.mxu0 0.0
    %855 = vmatpush1.msra.mxu0 0.0
    %856 = vmatprep.subr.mxu0 0.0
    %857 = vmatpush1.msra.mxu0 0.0
    %858 = vmatprep.subr.mxu0 0.0
    %859 = vmatpush1.msra.mxu0 0.0
    %860 = vmatprep.subr.mxu0 0.0
    %861 = vmatpush1.msra.mxu0 0.0
    %862 = vmatprep.subr.mxu0 0.0
    %863 = vmatpush1.msra.mxu0 0.0
    %864 = vmatprep.subr.mxu0 0.0
    %865 = vmatpush1.msra.mxu0 0.0
    %866 = vmatprep.subr.mxu0 0.0
    %867 = vmatpush1.msra.mxu0 0.0
    %868 = vmatprep.subr.mxu0 0.0
    %869 = vmatpush1.msra.mxu0 0.0
    %870 = vmatprep.subr.mxu0 0.0
    %871 = vmatpush1.msra.mxu0 0.0
    %872 = vmatprep.subr.mxu0 0.0
    %873 = vmatpush1.msra.mxu0 0.0
    %874 = vmatprep.subr.mxu0 0.0
    %875 = vmatpush1.msra.mxu0 0.0
    %876 = vmatprep.subr.mxu0 0.0
    %877 = vmatpush1.msra.mxu0 0.0
    %878 = vmatprep.subr.mxu0 0.0
    %879 = vmatpush1.msra.mxu0 0.0
    %880 = vmatprep.subr.mxu0 0.0
    %881 = vmatpush1.msra.mxu0 0.0
    %882 = vmatprep.subr.mxu0 0.0
    %883 = vmatpush1.msra.mxu0 0.0
    %884 = vmatprep.mubr.f32.mxu0 0.0
    %885 = vmatmul.mubr.f32.gmra.mrb[0].mxu0 %v815
    %v886 = vpop.f32.mrb[0].mxu0
    %v887 = vadd.f32 %v813, %v886
    %v888 = vpop.f32.mrb[0].mxu0
    %889 = vmatprep.mubr.f32.mxu0 0.0
    %890 = vmatmul.mubr.f32.gmra.mrb[0].mxu0 %v818
    %v891 = vpop.f32.mrb[0].mxu0
    %v892 = vadd.f32 %v813, %v891
    %v893 = vpop.f32.mrb[0].mxu0
    %894 = vdwg.mxu0
    %v895 = vmax.f32 %v887, 0.0
    %v896 = vmax.f32 %v892, 0.0
    %v897 = vlaneseq
    %v898 = vshrl.u32 %v897, 7
    %v899 = vsub.s32 7, %v898
    %v900 = vrot.slane %v101, %v899
    %v902 = vsel %vm411, %v895, 0
    %v905 = vsel %vm411, %v896, 0
    %907 = vmatprep.subr.mxu0 0.0
    %908 = vmatpush1.msra.mxu0 %v93
    %909 = vmatprep.subr.mxu0 0.0
    %910 = vmatpush1.msra.mxu0 %v94
    %911 = vmatprep.subr.mxu0 0.0
    %912 = vmatpush1.msra.mxu0 %v95
    %913 = vmatprep.subr.mxu0 0.0
    %914 = vmatpush1.msra.mxu0 %v96
    %915 = vmatprep.subr.mxu0 0.0
    %916 = vmatpush1.msra.mxu0 %v97
    %917 = vmatprep.subr.mxu0 0.0
    %918 = vmatpush1.msra.mxu0 %v98
    %919 = vmatprep.subr.mxu0 0.0
    %920 = vmatpush1.msra.mxu0 %v99
    %921 = vmatprep.subr.mxu0 0.0
    %922 = vmatpush1.msra.mxu0 %v100
    %923 = vmatprep.subr.mxu0 0.0
    %924 = vmatpush1.msra.mxu0 0.0
    %925 = vmatprep.subr.mxu0 0.0
    %926 = vmatpush1.msra.mxu0 0.0
    %927 = vmatprep.subr.mxu0 0.0
    %928 = vmatpush1.msra.mxu0 0.0
    %929 = vmatprep.subr.mxu0 0.0
    %930 = vmatpush1.msra.mxu0 0.0
    %931 = vmatprep.subr.mxu0 0.0
    %932 = vmatpush1.msra.mxu0 0.0
    %933 = vmatprep.subr.mxu0 0.0
    %934 = vmatpush1.msra.mxu0 0.0
    %935 = vmatprep.subr.mxu0 0.0
    %936 = vmatpush1.msra.mxu0 0.0
    %937 = vmatprep.subr.mxu0 0.0
    %938 = vmatpush1.msra.mxu0 0.0
    %939 = vmatprep.subr.mxu0 0.0
    %940 = vmatpush1.msra.mxu0 0.0
    %941 = vmatprep.subr.mxu0 0.0
    %942 = vmatpush1.msra.mxu0 0.0
    %943 = vmatprep.subr.mxu0 0.0
    %944 = vmatpush1.msra.mxu0 0.0
    %945 = vmatprep.subr.mxu0 0.0
    %946 = vmatpush1.msra.mxu0 0.0
    %947 = vmatprep.subr.mxu0 0.0
    %948 = vmatpush1.msra.mxu0 0.0
    %949 = vmatprep.subr.mxu0 0.0
    %950 = vmatpush1.msra.mxu0 0.0
    %951 = vmatprep.subr.mxu0 0.0
    %952 = vmatpush1.msra.mxu0 0.0
    %953 = vmatprep.subr.mxu0 0.0
    %954 = vmatpush1.msra.mxu0 0.0
    %955 = vmatprep.subr.mxu0 0.0
    %956 = vmatpush1.msra.mxu0 0.0
    %957 = vmatprep.subr.mxu0 0.0
    %958 = vmatpush1.msra.mxu0 0.0
    %959 = vmatprep.subr.mxu0 0.0
    %960 = vmatpush1.msra.mxu0 0.0
    %961 = vmatprep.subr.mxu0 0.0
    %962 = vmatpush1.msra.mxu0 0.0
    %963 = vmatprep.subr.mxu0 0.0
    %964 = vmatpush1.msra.mxu0 0.0
    %965 = vmatprep.subr.mxu0 0.0
    %966 = vmatpush1.msra.mxu0 0.0
    %967 = vmatprep.subr.mxu0 0.0
    %968 = vmatpush1.msra.mxu0 0.0
    %969 = vmatprep.subr.mxu0 0.0
    %970 = vmatpush1.msra.mxu0 0.0
    %971 = vmatprep.mubr.f32.mxu0 0.0
    %972 = vmatmul.mubr.f32.gmra.mrb[0].mxu0 %v902
    %v973 = vpop.f32.mrb[0].mxu0
    %v974 = vadd.f32 %v900, %v973
    %v975 = vpop.f32.mrb[0].mxu0
    %976 = vmatprep.mubr.f32.mxu0 0.0
    %977 = vmatmul.mubr.f32.gmra.mrb[0].mxu0 %v905
    %v978 = vpop.f32.mrb[0].mxu0
    %v979 = vadd.f32 %v900, %v978
    %v980 = vpop.f32.mrb[0].mxu0
    %981 = vdwg.mxu0
    %v982 = vadd.f32 %v974, %v770
    %v983 = vadd.f32 %v979, %v771
    %984 = vst.msk [vmem:[#allocation10] sm:$0xff] %vm102, %v982
    %985 = vst.msk [vmem:[#allocation10 + $0x8] sm:$0xff] %vm102, %v983
    // Predicated region
    $region34: #{tpu_custom_call.1} parent=1 // pred_check
      _
    $region35: #{tpu_custom_call.1} parent=1 // pred_check_branch
      %987 = sbr.rel (0) target = $region37
    $region36: #{tpu_custom_call.1} parent=1 // pred_region
      %s989 = ssub.s32 256, 256
      %990 = vsyncadd [#allocation4], %s989
      %s991 = sshll.u32 [#allocation10], 4
      %s992 = int_to_ptr.vmem [resolvable:$true] %s991
      %997 = dma.vmem_to_hbm [thread:$0]  %s992, 256, %s4, [#allocation4], 128, 128, 8
    $region37: #{tpu_custom_call.1} parent=1 // pred_fallthru
      _
    // Predicated region
    $region38: #{tpu_custom_call.1} parent=1 // pred_check
      _
    $region39: #{tpu_custom_call.1} parent=1 // pred_check_branch
      %999 = sbr.rel (0) target = $region41
    $region40: #{tpu_custom_call.1} parent=1 // pred_region
      %1000 = dma.done [#allocation4], 256
    $region41: #{tpu_custom_call.1} parent=1 // pred_fallthru
      _
    %1001 = vsyncpa [#allocation3], 1
    %1002 = vsyncpa [#allocation6], 1
    %1003 = vsyncpa [#allocation9], 1
    %1004 = vsyncpa [#allocation4], 1

</llo_original>
